<compile_context>
chip_gen: v6e
topology: v6e:2x2x1
jax: 0.10.0
libtpu: 0.0.40
codegen_flags: <defaults>
</compile_context>

<pallas_src>
from functools import partial

import numpy as np
import jax
import jax.numpy as jnp
from jax.experimental import pallas as pl
from jax.experimental.pallas import tpu as pltpu


def _round_up(x, m):
    return ((x + m - 1) // m) * m


def _healthy_plant_kernel(x_ref, wb_ref, bb_ref, wc_ref, bc_ref, out_ref):
    # backbone: flatten(x) @ Wb + bb, ReLU.  Filter already folded into Wb/bb columns.
    # x arrives f32 and is cast to bf16 in-kernel (feeds MXU bf16 operands, f32 accumulate)
    # so the HBM stream of x stays at 4 B/elem read exactly once.
    x_bf16 = x_ref[...].astype(jnp.bfloat16)
    feat = jnp.dot(x_bf16, wb_ref[...], preferred_element_type=jnp.float32) + bb_ref[...]
    feat = jnp.maximum(feat, 0.0)                       # f32 epilogue (bf16 only on MXU operands)

    # classifier (normalization folded into Wc'/bc'): logits, then first-occurrence argmax.
    logits = jnp.dot(feat, wc_ref[...], preferred_element_type=jnp.float32) + bc_ref[...]
    max_val = jnp.max(logits, axis=-1, keepdims=True)
    col_idx = jax.lax.broadcasted_iota(jnp.int32, logits.shape, 1)
    big = jnp.int32(2 ** 30)
    cand = jnp.where(logits == max_val, col_idx, big)
    # TODO(synk): for very large batches, emit a lane-dense (num_tiles, TM) int32 label row
    # per tile instead of the (TM, 1) column store; output bytes are negligible vs. the x
    # stream here, so the simpler column store is kept.
    out_ref[...] = jnp.min(cand, axis=-1, keepdims=True).astype(jnp.int32)


def prepare_params(wb, bb, clf_mean, clf_std, wc, bc, indices):
    """One-time host-side weight prep: apply `indices` filter to Wb/bb, fold the
    (f - mean)/std normalization into Wc/bc, and cast the big matmul weight to bf16.
    Math is identical to filter()+normalize()+linear-classify of the original module."""
    wb = np.asarray(wb, np.float32)
    bb = np.asarray(bb, np.float32).reshape(1, -1)
    wc = np.asarray(wc, np.float32)
    bc = np.asarray(bc, np.float32).reshape(1, -1)

    if indices is not None:                       # filter(): select feature columns;
        wb = wb[:, indices]                       # commutes with the elementwise ReLU.
        bb = bb[:, indices]

    f_sel = wb.shape[1]
    mean = np.zeros((f_sel,), np.float32) if clf_mean is None \
        else np.asarray(clf_mean, np.float32).reshape(-1)
    std = np.ones((f_sel,), np.float32) if clf_std is None \
        else np.asarray(clf_std, np.float32).reshape(-1)

    # ((f - mean)/std) @ Wc + bc  ==  f @ (Wc/std[:,None]) + (bc - (mean/std) @ Wc)
    wc_folded = wc / std[:, None]
    bc_folded = bc - (mean / std) @ wc

    return (jnp.asarray(wb, jnp.bfloat16),         # bf16 weights for the dominant matmul
            jnp.asarray(bb, jnp.float32),
            jnp.asarray(wc_folded, jnp.float32),
            jnp.asarray(bc_folded.reshape(1, -1), jnp.float32))


@partial(jax.jit, static_argnames=("block_m",))
def healthy_plant_predict(x_nchw, wb_bf16, bb, wc_f, bc_f, *, block_m=256):
    """Full HealthyPlant.forward on pre-folded params. Returns int32 labels [N, 1]."""
    n = x_nchw.shape[0]
    x_flat = x_nchw.reshape(n, -1)                  # glue: NCHW -> [N, C*H*W]; stays f32
    d = x_flat.shape[1]
    f_sel = wb_bf16.shape[1]
    num_classes = wc_f.shape[1]

    # Batch tile: TM=256 fills the v6e/v7x MXU M dim and amortizes per-step overhead
    # (also fine on v5e); shrink to the (8-aligned) batch when N is small.
    tm = min(block_m, _round_up(n, 8))
    n_pad = _round_up(n, tm)
    if n_pad != n:
        x_flat = jnp.pad(x_flat, ((0, n_pad - n), (0, 0)))
    num_tiles = n_pad // tm

    labels = pl.pallas_call(
        _healthy_plant_kernel,
        out_shape=jax.ShapeDtypeStruct((n_pad, 1), jnp.int32),
        grid=(num_tiles,),
        in_specs=[
            pl.BlockSpec((tm, d), lambda i: (i, 0)),               # x tile, streamed/pipelined
            pl.BlockSpec((d, f_sel), lambda i: (0, 0)),            # Wb (bf16), VMEM-resident
            pl.BlockSpec((1, f_sel), lambda i: (0, 0)),            # bb, resident
            pl.BlockSpec((f_sel, num_classes), lambda i: (0, 0)),  # Wc' (normalize folded), resident
            pl.BlockSpec((1, num_classes), lambda i: (0, 0)),      # bc' (normalize folded), resident
        ],
        out_specs=pl.BlockSpec((tm, 1), lambda i: (i, 0)),
        # Batch axis is embarrassingly parallel -> v7x shards it across both TensorCores;
        # neutral on v5e/v6e.  Working set is tiny, so no vmem_limit_bytes override needed.
        compiler_params=pltpu.CompilerParams(dimension_semantics=("parallel",)),
    )(x_flat, wb_bf16, bb, wc_f, bc_f)
    return labels[:n]


# ----------------------------- reference / checks -----------------------------

def _folded_logits_reference(x_nchw, wb_bf16, bb, wc_f, bc_f):
    """f32 numpy logits using the SAME folded weights and bf16-rounded x/Wb the kernel sees."""
    n = x_nchw.shape[0]
    x = np.asarray(jnp.asarray(x_nchw, jnp.float32).astype(jnp.bfloat16).astype(jnp.float32))
    x = x.reshape(n, -1)
    wb = np.asarray(jnp.asarray(wb_bf16).astype(jnp.float32))
    feat = np.maximum(x @ wb + np.asarray(bb), 0.0)
    return feat @ np.asarray(wc_f) + np.asarray(bc_f)


def _unfolded_logits_reference(x_nchw, wb, bb, clf_mean, clf_std, wc, bc, indices):
    """f32 numpy logits of the ORIGINAL (unfolded) module semantics (backbone -> filter ->
    normalize -> linear classifier), with the same bf16 rounding of x/Wb as the kernel."""
    n = x_nchw.shape[0]
    x = np.asarray(jnp.asarray(x_nchw, jnp.float32).astype(jnp.bfloat16).astype(jnp.float32))
    x = x.reshape(n, -1)
    wb32 = np.asarray(jnp.asarray(wb).astype(jnp.bfloat16).astype(jnp.float32))
    feat = np.maximum(x @ wb32 + np.asarray(bb), 0.0)
    if indices is not None:
        feat = feat[:, indices]
    if clf_mean is not None:
        feat = feat - np.asarray(clf_mean)
    if clf_std is not None:
        feat = feat / np.asarray(clf_std)
    return feat @ np.asarray(wc) + np.asarray(bc)


def _check_predictions(pred, ref_logits, rel_tol=5e-3):
    """Tie-tolerant argmax check: the predicted class's reference logit must be within
    tolerance of the row max; where the top-2 margin is decisive, argmax must match exactly."""
    pred = np.asarray(pred).reshape(-1)
    rows = np.arange(ref_logits.shape[0])
    pred_logit = ref_logits[rows, pred]
    max_logit = ref_logits.max(axis=-1)
    tol = rel_tol * np.maximum(np.abs(max_logit), 1.0)
    assert np.all(pred_logit >= max_logit - tol), \
        "kernel argmax not within tolerance of reference max logit"
    srt = np.sort(ref_logits, axis=-1)
    decisive = (srt[:, -1] - srt[:, -2]) > 2.0 * tol
    assert np.array_equal(pred[decisive], np.argmax(ref_logits, axis=-1)[decisive]), \
        "kernel argmax differs from reference on a decisive row"


if __name__ == "__main__":
    # Small deterministic setup: C=4, H=W=16 -> D=1024 backbone input,
    # 64 backbone features, keep 32 via `indices`, 4 classes.
    C, H, W = 4, 16, 16
    D = C * H * W
    F_BACK, NUM_CLASSES = 64, 4

    key = jax.random.PRNGKey(0)
    kwb, kbb, km, ks, kwc, kbc, kx1, kx2 = jax.random.split(key, 8)

    wb = jax.random.normal(kwb, (D, F_BACK), jnp.float32) * 0.05
    bb = jax.random.normal(kbb, (1, F_BACK), jnp.float32) * 0.1

    indices = np.arange(0, F_BACK, 2)          # keep every other feature -> 32
    F_SEL = indices.size

    clf_mean = jax.random.normal(km, (F_SEL,), jnp.float32) * 0.1
    clf_std = jnp.abs(jax.random.normal(ks, (F_SEL,), jnp.float32)) + 0.5

    wc = jax.random.normal(kwc, (F_SEL, NUM_CLASSES), jnp.float32) * 0.1
    bc = jax.random.normal(kbc, (1, NUM_CLASSES), jnp.float32) * 0.1

    # One-time weight preparation (filter + normalization folding, bf16 cast of Wb).
    wb_p, bb_p, wc_p, bc_p = prepare_params(wb, bb, clf_mean, clf_std, wc, bc, indices)

    # N=8: small-batch path (single tile).  N=300: exercises multi-tile grid + padding.
    for n, kx in ((8, kx1), (300, kx2)):
        x = jax.random.normal(kx, (n, C, H, W), jnp.float32)

        pred = jax.block_until_ready(healthy_plant_predict(x, wb_p, bb_p, wc_p, bc_p))
        assert pred.shape == (n, 1)

        folded_ref = _folded_logits_reference(x, wb_p, bb_p, wc_p, bc_p)
        unfolded_ref = _unfolded_logits_reference(x, wb, bb, clf_mean, clf_std, wc, bc, indices)
        # Folding filter + normalization into the weights preserves the module's math.
        np.testing.assert_allclose(folded_ref, unfolded_ref, rtol=1e-4, atol=1e-4)
        # Tie-tolerant argmax equivalence of the kernel vs. the reference logits.
        _check_predictions(pred, folded_ref)

    print("KERNEL_OK")
</pallas_src>

<mosaic_0001>
module attributes {stable_mosaic.version = 11 : i64} {
  func.func @_healthy_plant_kernel(%arg0: i32, %arg1: memref<8x1024xf32, #tpu.memory_space<vmem>>, %arg2: memref<1024x32xbf16, #tpu.memory_space<vmem>>, %arg3: memref<1x32xf32, #tpu.memory_space<vmem>>, %arg4: memref<32x4xf32, #tpu.memory_space<vmem>>, %arg5: memref<1x4xf32, #tpu.memory_space<vmem>>, %arg6: memref<8x1xi32, #tpu.memory_space<vmem>>) attributes {dimension_semantics = [#tpu.dimension_semantics<parallel>], iteration_bounds = array<i64: 1>, scalar_prefetch = 0 : i64, scratch_operands = 0 : i64, tpu.core_type = #tpu.core_type<tc>, window_params = [{transform_indices = @transform_0, window_bounds = array<i64: 8, 1024>}, {pipeline_mode = #tpu.pipeline_mode<synchronous>, transform_indices = @transform_1, window_bounds = array<i64: 1024, 32>}, {pipeline_mode = #tpu.pipeline_mode<synchronous>, transform_indices = @transform_2, window_bounds = array<i64: 1, 32>}, {pipeline_mode = #tpu.pipeline_mode<synchronous>, transform_indices = @transform_3, window_bounds = array<i64: 32, 4>}, {pipeline_mode = #tpu.pipeline_mode<synchronous>, transform_indices = @transform_4, window_bounds = array<i64: 1, 4>}, {transform_indices = @transform_5, window_bounds = array<i64: 8, 1>}]} {
    %c0 = arith.constant 0 : index
    %c0_0 = arith.constant 0 : index
    %0 = vector.load %arg1[%c0, %c0_0] : memref<8x1024xf32, #tpu.memory_space<vmem>>, vector<8x1024xf32>
    %1 = arith.truncf %0 : vector<8x1024xf32> to vector<8x1024xbf16>
    %c0_1 = arith.constant 0 : index
    %c0_2 = arith.constant 0 : index
    %2 = vector.load %arg2[%c0_1, %c0_2] : memref<1024x32xbf16, #tpu.memory_space<vmem>>, vector<1024x32xbf16>
    %cst = arith.constant dense<0.000000e+00> : vector<8x32xf32>
    %3 = tpu.matmul %1, %2, %cst {dimension_numbers = #tpu.dot_dimension_numbers<[1], [0], [0], [1], [0, 0, 1, 1], [], []>} : vector<8x1024xbf16>, vector<1024x32xbf16>, vector<8x32xf32> -> vector<8x32xf32>
    %c0_3 = arith.constant 0 : index
    %c0_4 = arith.constant 0 : index
    %4 = vector.load %arg3[%c0_3, %c0_4] : memref<1x32xf32, #tpu.memory_space<vmem>>, vector<1x32xf32>
    %5 = vector.broadcast %4 : vector<1x32xf32> to vector<8x32xf32>
    %6 = arith.addf %3, %5 : vector<8x32xf32>
    %cst_5 = arith.constant 0.000000e+00 : f32
    %7 = vector.broadcast %cst_5 : f32 to vector<8x32xf32>
    %8 = arith.maximumf %6, %7 : vector<8x32xf32>
    %c0_6 = arith.constant 0 : index
    %c0_7 = arith.constant 0 : index
    %9 = vector.load %arg4[%c0_6, %c0_7] : memref<32x4xf32, #tpu.memory_space<vmem>>, vector<32x4xf32>
    %cst_8 = arith.constant dense<0.000000e+00> : vector<8x4xf32>
    %10 = tpu.matmul %8, %9, %cst_8 {dimension_numbers = #tpu.dot_dimension_numbers<[1], [0], [0], [1], [0, 0, 1, 1], [], []>} : vector<8x32xf32>, vector<32x4xf32>, vector<8x4xf32> -> vector<8x4xf32>
    %c0_9 = arith.constant 0 : index
    %c0_10 = arith.constant 0 : index
    %11 = vector.load %arg5[%c0_9, %c0_10] : memref<1x4xf32, #tpu.memory_space<vmem>>, vector<1x4xf32>
    %12 = vector.broadcast %11 : vector<1x4xf32> to vector<8x4xf32>
    %13 = arith.addf %10, %12 : vector<8x4xf32>
    %cst_11 = arith.constant dense<0xFF800000> : vector<8xf32>
    %14 = vector.multi_reduction <maximumf>, %13, %cst_11 [1] : vector<8x4xf32> to vector<8xf32>
    %15 = vector.shape_cast %14 : vector<8xf32> to vector<8x1xf32>
    %16 = tpu.iota {dimensions = array<i32: 1>} : vector<8x4xi32>
    %17 = vector.broadcast %15 : vector<8x1xf32> to vector<8x4xf32>
    %18 = arith.cmpf oeq, %13, %17 : vector<8x4xf32>
    %c1073741824_i32 = arith.constant 1073741824 : i32
    %19 = vector.broadcast %c1073741824_i32 : i32 to vector<8x4xi32>
    %20 = arith.select %18, %16, %19 : vector<8x4xi1>, vector<8x4xi32>
    %cst_12 = arith.constant dense<2147483647> : vector<8xi32>
    %21 = vector.multi_reduction <minsi>, %20, %cst_12 [1] : vector<8x4xi32> to vector<8xi32>
    %22 = vector.shape_cast %21 : vector<8xi32> to vector<8x1xi32>
    %c0_13 = arith.constant 0 : index
    %c0_14 = arith.constant 0 : index
    %23 = vector.load %arg6[%c0_13, %c0_14] : memref<8x1xi32, #tpu.memory_space<vmem>>, vector<8x1xi32>
    tpu.vector_store %arg6[%c0_13, %c0_14], %22 {strides = array<i32>} : memref<8x1xi32, #tpu.memory_space<vmem>>, vector<8x1xi32>,
    return
  }
  func.func @transform_0(%arg0: i32) -> (i32, i32) {
    %c0_i32 = arith.constant 0 : i32
    %c0_i32_0 = arith.constant 0 : i32
    return %arg0, %c0_i32 : i32, i32
  }
  func.func @transform_1(%arg0: i32) -> (i32, i32) {
    %c0_i32 = arith.constant 0 : i32
    %c0_i32_0 = arith.constant 0 : i32
    %c0_i32_1 = arith.constant 0 : i32
    return %c0_i32, %c0_i32_0 : i32, i32
  }
  func.func @transform_2(%arg0: i32) -> (i32, i32) {
    %c0_i32 = arith.constant 0 : i32
    %c0_i32_0 = arith.constant 0 : i32
    %c0_i32_1 = arith.constant 0 : i32
    return %c0_i32, %c0_i32_0 : i32, i32
  }
  func.func @transform_3(%arg0: i32) -> (i32, i32) {
    %c0_i32 = arith.constant 0 : i32
    %c0_i32_0 = arith.constant 0 : i32
    %c0_i32_1 = arith.constant 0 : i32
    return %c0_i32, %c0_i32_0 : i32, i32
  }
  func.func @transform_4(%arg0: i32) -> (i32, i32) {
    %c0_i32 = arith.constant 0 : i32
    %c0_i32_0 = arith.constant 0 : i32
    %c0_i32_1 = arith.constant 0 : i32
    return %c0_i32, %c0_i32_0 : i32, i32
  }
  func.func @transform_5(%arg0: i32) -> (i32, i32) {
    %c0_i32 = arith.constant 0 : i32
    %c0_i32_0 = arith.constant 0 : i32
    return %arg0, %c0_i32 : i32, i32
  }
}

</mosaic_0001>

<llo_original>
// kernel: healthy_plant_predict.1
$region0: #{healthy_plant_predict.1}
  #allocation0 [shape = 'u32[]', space=smem, size = 0x4, offset = 0x4, fixed_abs, tag = 'smem constant byte address 0x4 - core index']
  #allocation1 [shape = 'u32[144,128]{1,0:T(1,128)}', space=vmem, size = 0x12000, scoped, tag = 'internal scratch']
  %s0 = inlined_call_operand.vmem [shape: f32[8,1024], index: 0, kind: input, shape index: {}]
  %s1 = inlined_call_operand.vmem [shape: bf16[1024,32], index: 1, kind: input, shape index: {}]
  %s2 = inlined_call_operand.vmem [shape: f32[1,32], index: 2, kind: input, shape index: {}]
  %s3 = inlined_call_operand.vmem [shape: f32[32,4], index: 3, kind: input, shape index: {}]
  %s4 = inlined_call_operand.vmem [shape: f32[1,4], index: 4, kind: input, shape index: {}]
  %s5 = inlined_call_operand.vmem [shape: s32[8,1], index: 5, kind: output, shape index: {}]
  %s6 = sld [smem:[#allocation0]]
  $region30: #{healthy_plant_predict.1} parent=0
    _
  %s8 = ssub.s32 1, %s6
  %s9 = scalar_select 0, %s8, %s6
  // Predicated region
  $region2: #{healthy_plant_predict.1} parent=0 // pred_check
    _
  $region3: #{healthy_plant_predict.1} parent=0 // pred_check_branch
    %11 = sbr.rel (0) target = $region5
  $region4: #{healthy_plant_predict.1} parent=0 // pred_region
    _
  $region5: #{healthy_plant_predict.1} parent=0 // pred_fallthru
    _
  // Predicated region
  $region6: #{healthy_plant_predict.1} parent=0 // pred_check
    _
  $region7: #{healthy_plant_predict.1} parent=0 // pred_check_branch
    %13 = sbr.rel (0) target = $region9
  $region8: #{healthy_plant_predict.1} parent=0 // pred_region
    _
  $region9: #{healthy_plant_predict.1} parent=0 // pred_fallthru
    _
  // Predicated region
  $region10: #{healthy_plant_predict.1} parent=0 // pred_check
    _
  $region11: #{healthy_plant_predict.1} parent=0 // pred_check_branch
    %15 = sbr.rel (0) target = $region13
  $region12: #{healthy_plant_predict.1} parent=0 // pred_region
    _
  $region13: #{healthy_plant_predict.1} parent=0 // pred_fallthru
    _
  // Predicated region
  $region14: #{healthy_plant_predict.1} parent=0 // pred_check
    _
  $region15: #{healthy_plant_predict.1} parent=0 // pred_check_branch
    %17 = sbr.rel (0) target = $region17
  $region16: #{healthy_plant_predict.1} parent=0 // pred_region
    _
  $region17: #{healthy_plant_predict.1} parent=0 // pred_fallthru
    _
  // Predicated region
  $region18: #{healthy_plant_predict.1} parent=0 // pred_check
    _
  $region19: #{healthy_plant_predict.1} parent=0 // pred_check_branch
    %19 = sbr.rel (0) target = $region21
  $region20: #{healthy_plant_predict.1} parent=0 // pred_region
    _
  $region21: #{healthy_plant_predict.1} parent=0 // pred_fallthru
    _
  %v21 = vld [vmem:[%s0] sm:$0xff]
  %v22 = vld [vmem:[%s0 + $0x8] sm:$0xff]
  %v23 = vld [vmem:[%s0 + $0x10] sm:$0xff]
  %v24 = vld [vmem:[%s0 + $0x18] sm:$0xff]
  %v25 = vld [vmem:[%s0 + $0x20] sm:$0xff]
  %v26 = vld [vmem:[%s0 + $0x28] sm:$0xff]
  %v27 = vld [vmem:[%s0 + $0x30] sm:$0xff]
  %v28 = vld [vmem:[%s0 + $0x38] sm:$0xff]
  %v29 = vpack.c.bf16 %v21, %v21
  %v30 = vpack.c.bf16 %v22, %v22
  %v31 = vpack.c.bf16 %v23, %v23
  %v32 = vpack.c.bf16 %v24, %v24
  %v33 = vpack.c.bf16 %v25, %v25
  %v34 = vpack.c.bf16 %v26, %v26
  %v35 = vpack.c.bf16 %v27, %v27
  %v36 = vpack.c.bf16 %v28, %v28
  %v37 = vld [vmem:[%s1] sm:$0xf]
  %v38 = vld [vmem:[%s1 + $0x4] sm:$0xf]
  %v39 = vld [vmem:[%s1 + $0x8] sm:$0xf]
  %v40 = vld [vmem:[%s1 + $0xc] sm:$0xf]
  %v41 = vld [vmem:[%s1 + $0x10] sm:$0xf]
  %v42 = vld [vmem:[%s1 + $0x14] sm:$0xf]
  %v43 = vld [vmem:[%s1 + $0x18] sm:$0xf]
  %v44 = vld [vmem:[%s1 + $0x1c] sm:$0xf]
  %v45 = vld [vmem:[%s1 + $0x20] sm:$0xf]
  %v46 = vld [vmem:[%s1 + $0x24] sm:$0xf]
  %v47 = vld [vmem:[%s1 + $0x28] sm:$0xf]
  %v48 = vld [vmem:[%s1 + $0x2c] sm:$0xf]
  %v49 = vld [vmem:[%s1 + $0x30] sm:$0xf]
  %v50 = vld [vmem:[%s1 + $0x34] sm:$0xf]
  %v51 = vld [vmem:[%s1 + $0x38] sm:$0xf]
  %v52 = vld [vmem:[%s1 + $0x3c] sm:$0xf]
  %v53 = vld [vmem:[%s1 + $0x40] sm:$0xf]
  %v54 = vld [vmem:[%s1 + $0x44] sm:$0xf]
  %v55 = vld [vmem:[%s1 + $0x48] sm:$0xf]
  %v56 = vld [vmem:[%s1 + $0x4c] sm:$0xf]
  %v57 = vld [vmem:[%s1 + $0x50] sm:$0xf]
  %v58 = vld [vmem:[%s1 + $0x54] sm:$0xf]
  %v59 = vld [vmem:[%s1 + $0x58] sm:$0xf]
  %v60 = vld [vmem:[%s1 + $0x5c] sm:$0xf]
  %v61 = vld [vmem:[%s1 + $0x60] sm:$0xf]
  %v62 = vld [vmem:[%s1 + $0x64] sm:$0xf]
  %v63 = vld [vmem:[%s1 + $0x68] sm:$0xf]
  %v64 = vld [vmem:[%s1 + $0x6c] sm:$0xf]
  %v65 = vld [vmem:[%s1 + $0x70] sm:$0xf]
  %v66 = vld [vmem:[%s1 + $0x74] sm:$0xf]
  %v67 = vld [vmem:[%s1 + $0x78] sm:$0xf]
  %v68 = vld [vmem:[%s1 + $0x7c] sm:$0xf]
  %v69 = vld [vmem:[%s1 + $0x80] sm:$0xf]
  %v70 = vld [vmem:[%s1 + $0x84] sm:$0xf]
  %v71 = vld [vmem:[%s1 + $0x88] sm:$0xf]
  %v72 = vld [vmem:[%s1 + $0x8c] sm:$0xf]
  %v73 = vld [vmem:[%s1 + $0x90] sm:$0xf]
  %v74 = vld [vmem:[%s1 + $0x94] sm:$0xf]
  %v75 = vld [vmem:[%s1 + $0x98] sm:$0xf]
  %v76 = vld [vmem:[%s1 + $0x9c] sm:$0xf]
  %v77 = vld [vmem:[%s1 + $0xa0] sm:$0xf]
  %v78 = vld [vmem:[%s1 + $0xa4] sm:$0xf]
  %v79 = vld [vmem:[%s1 + $0xa8] sm:$0xf]
  %v80 = vld [vmem:[%s1 + $0xac] sm:$0xf]
  %v81 = vld [vmem:[%s1 + $0xb0] sm:$0xf]
  %v82 = vld [vmem:[%s1 + $0xb4] sm:$0xf]
  %v83 = vld [vmem:[%s1 + $0xb8] sm:$0xf]
  %v84 = vld [vmem:[%s1 + $0xbc] sm:$0xf]
  %v85 = vld [vmem:[%s1 + $0xc0] sm:$0xf]
  %v86 = vld [vmem:[%s1 + $0xc4] sm:$0xf]
  %v87 = vld [vmem:[%s1 + $0xc8] sm:$0xf]
  %v88 = vld [vmem:[%s1 + $0xcc] sm:$0xf]
  %v89 = vld [vmem:[%s1 + $0xd0] sm:$0xf]
  %v90 = vld [vmem:[%s1 + $0xd4] sm:$0xf]
  %v91 = vld [vmem:[%s1 + $0xd8] sm:$0xf]
  %v92 = vld [vmem:[%s1 + $0xdc] sm:$0xf]
  %v93 = vld [vmem:[%s1 + $0xe0] sm:$0xf]
  %v94 = vld [vmem:[%s1 + $0xe4] sm:$0xf]
  %v95 = vld [vmem:[%s1 + $0xe8] sm:$0xf]
  %v96 = vld [vmem:[%s1 + $0xec] sm:$0xf]
  %v97 = vld [vmem:[%s1 + $0xf0] sm:$0xf]
  %v98 = vld [vmem:[%s1 + $0xf4] sm:$0xf]
  %v99 = vld [vmem:[%s1 + $0xf8] sm:$0xf]
  %v100 = vld [vmem:[%s1 + $0xfc] sm:$0xf]
  %v101 = vld [vmem:[%s1 + $0x100] sm:$0xf]
  %v102 = vld [vmem:[%s1 + $0x104] sm:$0xf]
  %v103 = vld [vmem:[%s1 + $0x108] sm:$0xf]
  %v104 = vld [vmem:[%s1 + $0x10c] sm:$0xf]
  %v105 = vld [vmem:[%s1 + $0x110] sm:$0xf]
  %v106 = vld [vmem:[%s1 + $0x114] sm:$0xf]
  %v107 = vld [vmem:[%s1 + $0x118] sm:$0xf]
  %v108 = vld [vmem:[%s1 + $0x11c] sm:$0xf]
  %v109 = vld [vmem:[%s1 + $0x120] sm:$0xf]
  %v110 = vld [vmem:[%s1 + $0x124] sm:$0xf]
  %v111 = vld [vmem:[%s1 + $0x128] sm:$0xf]
  %v112 = vld [vmem:[%s1 + $0x12c] sm:$0xf]
  %v113 = vld [vmem:[%s1 + $0x130] sm:$0xf]
  %v114 = vld [vmem:[%s1 + $0x134] sm:$0xf]
  %v115 = vld [vmem:[%s1 + $0x138] sm:$0xf]
  %v116 = vld [vmem:[%s1 + $0x13c] sm:$0xf]
  %v117 = vld [vmem:[%s1 + $0x140] sm:$0xf]
  %v118 = vld [vmem:[%s1 + $0x144] sm:$0xf]
  %v119 = vld [vmem:[%s1 + $0x148] sm:$0xf]
  %v120 = vld [vmem:[%s1 + $0x14c] sm:$0xf]
  %v121 = vld [vmem:[%s1 + $0x150] sm:$0xf]
  %v122 = vld [vmem:[%s1 + $0x154] sm:$0xf]
  %v123 = vld [vmem:[%s1 + $0x158] sm:$0xf]
  %v124 = vld [vmem:[%s1 + $0x15c] sm:$0xf]
  %v125 = vld [vmem:[%s1 + $0x160] sm:$0xf]
  %v126 = vld [vmem:[%s1 + $0x164] sm:$0xf]
  %v127 = vld [vmem:[%s1 + $0x168] sm:$0xf]
  %v128 = vld [vmem:[%s1 + $0x16c] sm:$0xf]
  %v129 = vld [vmem:[%s1 + $0x170] sm:$0xf]
  %v130 = vld [vmem:[%s1 + $0x174] sm:$0xf]
  %v131 = vld [vmem:[%s1 + $0x178] sm:$0xf]
  %v132 = vld [vmem:[%s1 + $0x17c] sm:$0xf]
  %v133 = vld [vmem:[%s1 + $0x180] sm:$0xf]
  %v134 = vld [vmem:[%s1 + $0x184] sm:$0xf]
  %v135 = vld [vmem:[%s1 + $0x188] sm:$0xf]
  %v136 = vld [vmem:[%s1 + $0x18c] sm:$0xf]
  %v137 = vld [vmem:[%s1 + $0x190] sm:$0xf]
  %v138 = vld [vmem:[%s1 + $0x194] sm:$0xf]
  %v139 = vld [vmem:[%s1 + $0x198] sm:$0xf]
  %v140 = vld [vmem:[%s1 + $0x19c] sm:$0xf]
  %v141 = vld [vmem:[%s1 + $0x1a0] sm:$0xf]
  %v142 = vld [vmem:[%s1 + $0x1a4] sm:$0xf]
  %v143 = vld [vmem:[%s1 + $0x1a8] sm:$0xf]
  %v144 = vld [vmem:[%s1 + $0x1ac] sm:$0xf]
  %v145 = vld [vmem:[%s1 + $0x1b0] sm:$0xf]
  %v146 = vld [vmem:[%s1 + $0x1b4] sm:$0xf]
  %v147 = vld [vmem:[%s1 + $0x1b8] sm:$0xf]
  %v148 = vld [vmem:[%s1 + $0x1bc] sm:$0xf]
  %v149 = vld [vmem:[%s1 + $0x1c0] sm:$0xf]
  %v150 = vld [vmem:[%s1 + $0x1c4] sm:$0xf]
  %v151 = vld [vmem:[%s1 + $0x1c8] sm:$0xf]
  %v152 = vld [vmem:[%s1 + $0x1cc] sm:$0xf]
  %v153 = vld [vmem:[%s1 + $0x1d0] sm:$0xf]
  %v154 = vld [vmem:[%s1 + $0x1d4] sm:$0xf]
  %v155 = vld [vmem:[%s1 + $0x1d8] sm:$0xf]
  %v156 = vld [vmem:[%s1 + $0x1dc] sm:$0xf]
  %v157 = vld [vmem:[%s1 + $0x1e0] sm:$0xf]
  %v158 = vld [vmem:[%s1 + $0x1e4] sm:$0xf]
  %v159 = vld [vmem:[%s1 + $0x1e8] sm:$0xf]
  %v160 = vld [vmem:[%s1 + $0x1ec] sm:$0xf]
  %v161 = vld [vmem:[%s1 + $0x1f0] sm:$0xf]
  %v162 = vld [vmem:[%s1 + $0x1f4] sm:$0xf]
  %v163 = vld [vmem:[%s1 + $0x1f8] sm:$0xf]
  %v164 = vld [vmem:[%s1 + $0x1fc] sm:$0xf]
  %v165 = vld [vmem:[%s2] sm:$0x1]
  %v167 = vlaneseq
  %v168 = vshrl.u32 %v167, 7
  %v169 = vsub.s32 0, %v168
  %v170 = vrot.slane %v165, %v169
  %v300 = vunpack.c.l.b16 %v37
  %v301 = vunpack.c.l.b16 %v38
  %v302 = vunpack.c.l.b16 %v39
  %v303 = vunpack.c.l.b16 %v40
  %v304 = vunpack.c.l.b16 %v41
  %v305 = vunpack.c.l.b16 %v42
  %v306 = vunpack.c.l.b16 %v43
  %v307 = vunpack.c.l.b16 %v44
  %v308 = vunpack.c.l.b16 %v45
  %v309 = vunpack.c.l.b16 %v46
  %v310 = vunpack.c.l.b16 %v47
  %v311 = vunpack.c.l.b16 %v48
  %v312 = vunpack.c.l.b16 %v49
  %v313 = vunpack.c.l.b16 %v50
  %v314 = vunpack.c.l.b16 %v51
  %v315 = vunpack.c.l.b16 %v52
  %v316 = vunpack.c.l.b16 %v53
  %v317 = vunpack.c.l.b16 %v54
  %v318 = vunpack.c.l.b16 %v55
  %v319 = vunpack.c.l.b16 %v56
  %v320 = vunpack.c.l.b16 %v57
  %v321 = vunpack.c.l.b16 %v58
  %v322 = vunpack.c.l.b16 %v59
  %v323 = vunpack.c.l.b16 %v60
  %v324 = vunpack.c.l.b16 %v61
  %v325 = vunpack.c.l.b16 %v62
  %v326 = vunpack.c.l.b16 %v63
  %v327 = vunpack.c.l.b16 %v64
  %v328 = vunpack.c.l.b16 %v65
  %v329 = vunpack.c.l.b16 %v66
  %v330 = vunpack.c.l.b16 %v67
  %v331 = vunpack.c.l.b16 %v68
  %v332 = vunpack.c.l.b16 %v69
  %v333 = vunpack.c.l.b16 %v70
  %v334 = vunpack.c.l.b16 %v71
  %v335 = vunpack.c.l.b16 %v72
  %v336 = vunpack.c.l.b16 %v73
  %v337 = vunpack.c.l.b16 %v74
  %v338 = vunpack.c.l.b16 %v75
  %v339 = vunpack.c.l.b16 %v76
  %v340 = vunpack.c.l.b16 %v77
  %v341 = vunpack.c.l.b16 %v78
  %v342 = vunpack.c.l.b16 %v79
  %v343 = vunpack.c.l.b16 %v80
  %v344 = vunpack.c.l.b16 %v81
  %v345 = vunpack.c.l.b16 %v82
  %v346 = vunpack.c.l.b16 %v83
  %v347 = vunpack.c.l.b16 %v84
  %v348 = vunpack.c.l.b16 %v85
  %v349 = vunpack.c.l.b16 %v86
  %v350 = vunpack.c.l.b16 %v87
  %v351 = vunpack.c.l.b16 %v88
  %v352 = vunpack.c.l.b16 %v89
  %v353 = vunpack.c.l.b16 %v90
  %v354 = vunpack.c.l.b16 %v91
  %v355 = vunpack.c.l.b16 %v92
  %v356 = vunpack.c.l.b16 %v93
  %v357 = vunpack.c.l.b16 %v94
  %v358 = vunpack.c.l.b16 %v95
  %v359 = vunpack.c.l.b16 %v96
  %v360 = vunpack.c.l.b16 %v97
  %v361 = vunpack.c.l.b16 %v98
  %v362 = vunpack.c.l.b16 %v99
  %v363 = vunpack.c.l.b16 %v100
  %v364 = vunpack.c.l.b16 %v101
  %v365 = vunpack.c.l.b16 %v102
  %v366 = vunpack.c.l.b16 %v103
  %v367 = vunpack.c.l.b16 %v104
  %v368 = vunpack.c.l.b16 %v105
  %v369 = vunpack.c.l.b16 %v106
  %v370 = vunpack.c.l.b16 %v107
  %v371 = vunpack.c.l.b16 %v108
  %v372 = vunpack.c.l.b16 %v109
  %v373 = vunpack.c.l.b16 %v110
  %v374 = vunpack.c.l.b16 %v111
  %v375 = vunpack.c.l.b16 %v112
  %v376 = vunpack.c.l.b16 %v113
  %v377 = vunpack.c.l.b16 %v114
  %v378 = vunpack.c.l.b16 %v115
  %v379 = vunpack.c.l.b16 %v116
  %v380 = vunpack.c.l.b16 %v117
  %v381 = vunpack.c.l.b16 %v118
  %v382 = vunpack.c.l.b16 %v119
  %v383 = vunpack.c.l.b16 %v120
  %v384 = vunpack.c.l.b16 %v121
  %v385 = vunpack.c.l.b16 %v122
  %v386 = vunpack.c.l.b16 %v123
  %v387 = vunpack.c.l.b16 %v124
  %v388 = vunpack.c.l.b16 %v125
  %v389 = vunpack.c.l.b16 %v126
  %v390 = vunpack.c.l.b16 %v127
  %v391 = vunpack.c.l.b16 %v128
  %v392 = vunpack.c.l.b16 %v129
  %v393 = vunpack.c.l.b16 %v130
  %v394 = vunpack.c.l.b16 %v131
  %v395 = vunpack.c.l.b16 %v132
  %v396 = vunpack.c.l.b16 %v133
  %v397 = vunpack.c.l.b16 %v134
  %v398 = vunpack.c.l.b16 %v135
  %v399 = vunpack.c.l.b16 %v136
  %v400 = vunpack.c.l.b16 %v137
  %v401 = vunpack.c.l.b16 %v138
  %v402 = vunpack.c.l.b16 %v139
  %v403 = vunpack.c.l.b16 %v140
  %v404 = vunpack.c.l.b16 %v141
  %v405 = vunpack.c.l.b16 %v142
  %v406 = vunpack.c.l.b16 %v143
  %v407 = vunpack.c.l.b16 %v144
  %v408 = vunpack.c.l.b16 %v145
  %v409 = vunpack.c.l.b16 %v146
  %v410 = vunpack.c.l.b16 %v147
  %v411 = vunpack.c.l.b16 %v148
  %v412 = vunpack.c.l.b16 %v149
  %v413 = vunpack.c.l.b16 %v150
  %v414 = vunpack.c.l.b16 %v151
  %v415 = vunpack.c.l.b16 %v152
  %v416 = vunpack.c.l.b16 %v153
  %v417 = vunpack.c.l.b16 %v154
  %v418 = vunpack.c.l.b16 %v155
  %v419 = vunpack.c.l.b16 %v156
  %v420 = vunpack.c.l.b16 %v157
  %v421 = vunpack.c.l.b16 %v158
  %v422 = vunpack.c.l.b16 %v159
  %v423 = vunpack.c.l.b16 %v160
  %v424 = vunpack.c.l.b16 %v161
  %v425 = vunpack.c.l.b16 %v162
  %v426 = vunpack.c.l.b16 %v163
  %v427 = vunpack.c.l.b16 %v164
  %v428 = vpack.c.b16 %v301, %v300
  %v429 = vpack.c.b16 %v303, %v302
  %v430 = vpack.c.b16 %v305, %v304
  %v431 = vpack.c.b16 %v307, %v306
  %v432 = vpack.c.b16 %v309, %v308
  %v433 = vpack.c.b16 %v311, %v310
  %v434 = vpack.c.b16 %v313, %v312
  %v435 = vpack.c.b16 %v315, %v314
  %v436 = vpack.c.b16 %v317, %v316
  %v437 = vpack.c.b16 %v319, %v318
  %v438 = vpack.c.b16 %v321, %v320
  %v439 = vpack.c.b16 %v323, %v322
  %v440 = vpack.c.b16 %v325, %v324
  %v441 = vpack.c.b16 %v327, %v326
  %v442 = vpack.c.b16 %v329, %v328
  %v443 = vpack.c.b16 %v331, %v330
  %v444 = vpack.c.b16 %v333, %v332
  %v445 = vpack.c.b16 %v335, %v334
  %v446 = vpack.c.b16 %v337, %v336
  %v447 = vpack.c.b16 %v339, %v338
  %v448 = vpack.c.b16 %v341, %v340
  %v449 = vpack.c.b16 %v343, %v342
  %v450 = vpack.c.b16 %v345, %v344
  %v451 = vpack.c.b16 %v347, %v346
  %v452 = vpack.c.b16 %v349, %v348
  %v453 = vpack.c.b16 %v351, %v350
  %v454 = vpack.c.b16 %v353, %v352
  %v455 = vpack.c.b16 %v355, %v354
  %v456 = vpack.c.b16 %v357, %v356
  %v457 = vpack.c.b16 %v359, %v358
  %v458 = vpack.c.b16 %v361, %v360
  %v459 = vpack.c.b16 %v363, %v362
  %v460 = vpack.c.b16 %v365, %v364
  %v461 = vpack.c.b16 %v367, %v366
  %v462 = vpack.c.b16 %v369, %v368
  %v463 = vpack.c.b16 %v371, %v370
  %v464 = vpack.c.b16 %v373, %v372
  %v465 = vpack.c.b16 %v375, %v374
  %v466 = vpack.c.b16 %v377, %v376
  %v467 = vpack.c.b16 %v379, %v378
  %v468 = vpack.c.b16 %v381, %v380
  %v469 = vpack.c.b16 %v383, %v382
  %v470 = vpack.c.b16 %v385, %v384
  %v471 = vpack.c.b16 %v387, %v386
  %v472 = vpack.c.b16 %v389, %v388
  %v473 = vpack.c.b16 %v391, %v390
  %v474 = vpack.c.b16 %v393, %v392
  %v475 = vpack.c.b16 %v395, %v394
  %v476 = vpack.c.b16 %v397, %v396
  %v477 = vpack.c.b16 %v399, %v398
  %v478 = vpack.c.b16 %v401, %v400
  %v479 = vpack.c.b16 %v403, %v402
  %v480 = vpack.c.b16 %v405, %v404
  %v481 = vpack.c.b16 %v407, %v406
  %v482 = vpack.c.b16 %v409, %v408
  %v483 = vpack.c.b16 %v411, %v410
  %v484 = vpack.c.b16 %v413, %v412
  %v485 = vpack.c.b16 %v415, %v414
  %v486 = vpack.c.b16 %v417, %v416
  %v487 = vpack.c.b16 %v419, %v418
  %v488 = vpack.c.b16 %v421, %v420
  %v489 = vpack.c.b16 %v423, %v422
  %v490 = vpack.c.b16 %v425, %v424
  %v491 = vpack.c.b16 %v427, %v426
  %556 = vmatprep.subr.bf16.mxu0 0
  %557 = vmatpush1.bf16.msra.mxu0 %v435
  %558 = vmatprep.subr.bf16.mxu0 0
  %559 = vmatpush1.bf16.msra.mxu0 %v434
  %560 = vmatprep.subr.bf16.mxu0 0
  %561 = vmatpush1.bf16.msra.mxu0 %v433
  %562 = vmatprep.subr.bf16.mxu0 0
  %563 = vmatpush1.bf16.msra.mxu0 %v432
  %564 = vmatprep.subr.bf16.mxu0 0
  %565 = vmatpush1.bf16.msra.mxu0 %v431
  %566 = vmatprep.subr.bf16.mxu0 0
  %567 = vmatpush1.bf16.msra.mxu0 %v430
  %568 = vmatprep.subr.bf16.mxu0 0
  %569 = vmatpush1.bf16.msra.mxu0 %v429
  %570 = vmatprep.subr.bf16.mxu0 0
  %571 = vmatpush1.bf16.msra.mxu0 %v428
  %572 = vmatprep.subr.bf16.mxu0 0
  %573 = vmatpush2.bf16.msra.mxu0 %v443
  %574 = vmatprep.subr.bf16.mxu0 0
  %575 = vmatpush2.bf16.msra.mxu0 %v442
  %576 = vmatprep.subr.bf16.mxu0 0
  %577 = vmatpush2.bf16.msra.mxu0 %v441
  %578 = vmatprep.subr.bf16.mxu0 0
  %579 = vmatpush2.bf16.msra.mxu0 %v440
  %580 = vmatprep.subr.bf16.mxu0 0
  %581 = vmatpush2.bf16.msra.mxu0 %v439
  %582 = vmatprep.subr.bf16.mxu0 0
  %583 = vmatpush2.bf16.msra.mxu0 %v438
  %584 = vmatprep.subr.bf16.mxu0 0
  %585 = vmatpush2.bf16.msra.mxu0 %v437
  %586 = vmatprep.subr.bf16.mxu0 0
  %587 = vmatpush2.bf16.msra.mxu0 %v436
  %588 = vmatprep.mubr.bf16.mxu0 %v30
  %589 = vmatmul.mubr.bf16.gmra.mxu0 %v29
  %v590 = vpop.f32.mrf.mxu0
  %v591 = vadd.f32 %v170, %v590
  %v592 = vpop.f32.mrf.mxu0
  %v593 = vpop.f32.mrf.mxu0
  %v594 = vpop.f32.mrf.mxu0
  %595 = vdwg.mxu0
  %596 = vmatprep.subr.bf16.mxu0 0
  %597 = vmatpush1.bf16.msra.mxu0 %v451
  %598 = vmatprep.subr.bf16.mxu0 0
  %599 = vmatpush1.bf16.msra.mxu0 %v450
  %600 = vmatprep.subr.bf16.mxu0 0
  %601 = vmatpush1.bf16.msra.mxu0 %v449
  %602 = vmatprep.subr.bf16.mxu0 0
  %603 = vmatpush1.bf16.msra.mxu0 %v448
  %604 = vmatprep.subr.bf16.mxu0 0
  %605 = vmatpush1.bf16.msra.mxu0 %v447
  %606 = vmatprep.subr.bf16.mxu0 0
  %607 = vmatpush1.bf16.msra.mxu0 %v446
  %608 = vmatprep.subr.bf16.mxu0 0
  %609 = vmatpush1.bf16.msra.mxu0 %v445
  %610 = vmatprep.subr.bf16.mxu0 0
  %611 = vmatpush1.bf16.msra.mxu0 %v444
  %612 = vmatprep.subr.bf16.mxu0 0
  %613 = vmatpush2.bf16.msra.mxu0 %v459
  %614 = vmatprep.subr.bf16.mxu0 0
  %615 = vmatpush2.bf16.msra.mxu0 %v458
  %616 = vmatprep.subr.bf16.mxu0 0
  %617 = vmatpush2.bf16.msra.mxu0 %v457
  %618 = vmatprep.subr.bf16.mxu0 0
  %619 = vmatpush2.bf16.msra.mxu0 %v456
  %620 = vmatprep.subr.bf16.mxu0 0
  %621 = vmatpush2.bf16.msra.mxu0 %v455
  %622 = vmatprep.subr.bf16.mxu0 0
  %623 = vmatpush2.bf16.msra.mxu0 %v454
  %624 = vmatprep.subr.bf16.mxu0 0
  %625 = vmatpush2.bf16.msra.mxu0 %v453
  %626 = vmatprep.subr.bf16.mxu0 0
  %627 = vmatpush2.bf16.msra.mxu0 %v452
  %628 = vmatprep.mubr.bf16.mxu0 %v32
  %629 = vmatmul.mubr.bf16.gmra.mxu0 %v31
  %v630 = vpop.f32.mrf.mxu0
  %v631 = vadd.f32 %v591, %v630
  %v632 = vpop.f32.mrf.mxu0
  %v633 = vpop.f32.mrf.mxu0
  %v634 = vpop.f32.mrf.mxu0
  %635 = vdwg.mxu0
  %636 = vmatprep.subr.bf16.mxu0 0
  %637 = vmatpush1.bf16.msra.mxu0 %v467
  %638 = vmatprep.subr.bf16.mxu0 0
  %639 = vmatpush1.bf16.msra.mxu0 %v466
  %640 = vmatprep.subr.bf16.mxu0 0
  %641 = vmatpush1.bf16.msra.mxu0 %v465
  %642 = vmatprep.subr.bf16.mxu0 0
  %643 = vmatpush1.bf16.msra.mxu0 %v464
  %644 = vmatprep.subr.bf16.mxu0 0
  %645 = vmatpush1.bf16.msra.mxu0 %v463
  %646 = vmatprep.subr.bf16.mxu0 0
  %647 = vmatpush1.bf16.msra.mxu0 %v462
  %648 = vmatprep.subr.bf16.mxu0 0
  %649 = vmatpush1.bf16.msra.mxu0 %v461
  %650 = vmatprep.subr.bf16.mxu0 0
  %651 = vmatpush1.bf16.msra.mxu0 %v460
  %652 = vmatprep.subr.bf16.mxu0 0
  %653 = vmatpush2.bf16.msra.mxu0 %v475
  %654 = vmatprep.subr.bf16.mxu0 0
  %655 = vmatpush2.bf16.msra.mxu0 %v474
  %656 = vmatprep.subr.bf16.mxu0 0
  %657 = vmatpush2.bf16.msra.mxu0 %v473
  %658 = vmatprep.subr.bf16.mxu0 0
  %659 = vmatpush2.bf16.msra.mxu0 %v472
  %660 = vmatprep.subr.bf16.mxu0 0
  %661 = vmatpush2.bf16.msra.mxu0 %v471
  %662 = vmatprep.subr.bf16.mxu0 0
  %663 = vmatpush2.bf16.msra.mxu0 %v470
  %664 = vmatprep.subr.bf16.mxu0 0
  %665 = vmatpush2.bf16.msra.mxu0 %v469
  %666 = vmatprep.subr.bf16.mxu0 0
  %667 = vmatpush2.bf16.msra.mxu0 %v468
  %668 = vmatprep.mubr.bf16.mxu0 %v34
  %669 = vmatmul.mubr.bf16.gmra.mxu0 %v33
  %v670 = vpop.f32.mrf.mxu0
  %v671 = vadd.f32 %v631, %v670
  %v672 = vpop.f32.mrf.mxu0
  %v673 = vpop.f32.mrf.mxu0
  %v674 = vpop.f32.mrf.mxu0
  %675 = vdwg.mxu0
  %676 = vmatprep.subr.bf16.mxu0 0
  %677 = vmatpush1.bf16.msra.mxu0 %v483
  %678 = vmatprep.subr.bf16.mxu0 0
  %679 = vmatpush1.bf16.msra.mxu0 %v482
  %680 = vmatprep.subr.bf16.mxu0 0
  %681 = vmatpush1.bf16.msra.mxu0 %v481
  %682 = vmatprep.subr.bf16.mxu0 0
  %683 = vmatpush1.bf16.msra.mxu0 %v480
  %684 = vmatprep.subr.bf16.mxu0 0
  %685 = vmatpush1.bf16.msra.mxu0 %v479
  %686 = vmatprep.subr.bf16.mxu0 0
  %687 = vmatpush1.bf16.msra.mxu0 %v478
  %688 = vmatprep.subr.bf16.mxu0 0
  %689 = vmatpush1.bf16.msra.mxu0 %v477
  %690 = vmatprep.subr.bf16.mxu0 0
  %691 = vmatpush1.bf16.msra.mxu0 %v476
  %692 = vmatprep.subr.bf16.mxu0 0
  %693 = vmatpush2.bf16.msra.mxu0 %v491
  %694 = vmatprep.subr.bf16.mxu0 0
  %695 = vmatpush2.bf16.msra.mxu0 %v490
  %696 = vmatprep.subr.bf16.mxu0 0
  %697 = vmatpush2.bf16.msra.mxu0 %v489
  %698 = vmatprep.subr.bf16.mxu0 0
  %699 = vmatpush2.bf16.msra.mxu0 %v488
  %700 = vmatprep.subr.bf16.mxu0 0
  %701 = vmatpush2.bf16.msra.mxu0 %v487
  %702 = vmatprep.subr.bf16.mxu0 0
  %703 = vmatpush2.bf16.msra.mxu0 %v486
  %704 = vmatprep.subr.bf16.mxu0 0
  %705 = vmatpush2.bf16.msra.mxu0 %v485
  %706 = vmatprep.subr.bf16.mxu0 0
  %707 = vmatpush2.bf16.msra.mxu0 %v484
  %708 = vmatprep.mubr.bf16.mxu0 %v36
  %709 = vmatmul.mubr.bf16.gmra.mxu0 %v35
  %v710 = vpop.f32.mrf.mxu0
  %v711 = vadd.f32 %v671, %v710
  %v712 = vpop.f32.mrf.mxu0
  %v713 = vpop.f32.mrf.mxu0
  %v714 = vpop.f32.mrf.mxu0
  %715 = vdwg.mxu0
  %v716 = vmax.f32 %v711, 0.0
  %v717 = vld [vmem:[%s3] sm:$0xff]
  %v718 = vld [vmem:[%s3 + $0x8] sm:$0xff]
  %v719 = vld [vmem:[%s3 + $0x10] sm:$0xff]
  %v720 = vld [vmem:[%s3 + $0x18] sm:$0xff]
  %v721 = vld [vmem:[%s4] sm:$0x1]
  %v723 = vlaneseq
  %v724 = vshrl.u32 %v723, 7
  %v725 = vsub.s32 0, %v724
  %v726 = vrot.slane %v721, %v725
  %vm728 = vcmask 261120
  %v730 = vsel %vm728, %v716, 0
  %732 = vmatprep.subr.mxu0 0.0
  %733 = vmatpush1.msra.mxu0 0.0
  %734 = vmatprep.subr.mxu0 0.0
  %735 = vmatpush1.msra.mxu0 0.0
  %736 = vmatprep.subr.mxu0 0.0
  %737 = vmatpush1.msra.mxu0 0.0
  %738 = vmatprep.subr.mxu0 0.0
  %739 = vmatpush1.msra.mxu0 0.0
  %740 = vmatprep.subr.mxu0 0.0
  %741 = vmatpush1.msra.mxu0 0.0
  %742 = vmatprep.subr.mxu0 0.0
  %743 = vmatpush1.msra.mxu0 0.0
  %744 = vmatprep.subr.mxu0 0.0
  %745 = vmatpush1.msra.mxu0 0.0
  %746 = vmatprep.subr.mxu0 0.0
  %747 = vmatpush1.msra.mxu0 0.0
  %748 = vmatprep.subr.mxu0 0.0
  %749 = vmatpush1.msra.mxu0 0.0
  %750 = vmatprep.subr.mxu0 0.0
  %751 = vmatpush1.msra.mxu0 0.0
  %752 = vmatprep.subr.mxu0 0.0
  %753 = vmatpush1.msra.mxu0 0.0
  %754 = vmatprep.subr.mxu0 0.0
  %755 = vmatpush1.msra.mxu0 0.0
  %756 = vmatprep.subr.mxu0 0.0
  %757 = vmatpush1.msra.mxu0 %v720
  %758 = vmatprep.subr.mxu0 0.0
  %759 = vmatpush1.msra.mxu0 %v719
  %760 = vmatprep.subr.mxu0 0.0
  %761 = vmatpush1.msra.mxu0 %v718
  %762 = vmatprep.subr.mxu0 0.0
  %763 = vmatpush1.msra.mxu0 %v717
  %764 = vmatprep.subr.mxu0 0.0
  %765 = vmatpush2.msra.mxu0 0.0
  %766 = vmatprep.subr.mxu0 0.0
  %767 = vmatpush2.msra.mxu0 0.0
  %768 = vmatprep.subr.mxu0 0.0
  %769 = vmatpush2.msra.mxu0 0.0
  %770 = vmatprep.subr.mxu0 0.0
  %771 = vmatpush2.msra.mxu0 0.0
  %772 = vmatprep.subr.mxu0 0.0
  %773 = vmatpush2.msra.mxu0 0.0
  %774 = vmatprep.subr.mxu0 0.0
  %775 = vmatpush2.msra.mxu0 0.0
  %776 = vmatprep.subr.mxu0 0.0
  %777 = vmatpush2.msra.mxu0 0.0
  %778 = vmatprep.subr.mxu0 0.0
  %779 = vmatpush2.msra.mxu0 0.0
  %780 = vmatprep.subr.mxu0 0.0
  %781 = vmatpush2.msra.mxu0 0.0
  %782 = vmatprep.subr.mxu0 0.0
  %783 = vmatpush2.msra.mxu0 0.0
  %784 = vmatprep.subr.mxu0 0.0
  %785 = vmatpush2.msra.mxu0 0.0
  %786 = vmatprep.subr.mxu0 0.0
  %787 = vmatpush2.msra.mxu0 0.0
  %788 = vmatprep.subr.mxu0 0.0
  %789 = vmatpush2.msra.mxu0 0.0
  %790 = vmatprep.subr.mxu0 0.0
  %791 = vmatpush2.msra.mxu0 0.0
  %792 = vmatprep.subr.mxu0 0.0
  %793 = vmatpush2.msra.mxu0 0.0
  %794 = vmatprep.subr.mxu0 0.0
  %795 = vmatpush2.msra.mxu0 0.0
  %796 = vmatprep.mubr.f32.mxu0 0.0
  %797 = vmatmul.mubr.f32.gmra.mxu0 %v730
  %v798 = vpop.f32.mrf.mxu0
  %v799 = vadd.f32 %v726, %v798
  %v800 = vpop.f32.mrf.mxu0
  %801 = vdwg.mxu0
  %vm802 = vcmask 31744
  %v803 = vsel %vm802, %v799, -inf
  %804 = vmax.xlane.f32.xlu0 %v803
  %v805 = vpop.xlane.xlu0 %804
  %v806 = vlaneseq
  %v807 = vand.u32 %v806, 127
  %vm808 = vcmp.eq.f32.partialorder %v799, %v805
  %v809 = vsel %vm808, %v807, 1073741824
  %v810 = vsel %vm802, %v809, 2147483647
  %v811 = vand.u32 %v810, 65535
  %v812 = vshra.s32 %v810, 16
  %v813 = vcvt.s32.f32 %v811
  %v814 = vcvt.s32.f32 %v812
  %815 = vmin.xlane.f32.xlu0 %v814
  %v816 = vpop.xlane.xlu0 %815
  %vm817 = vcmp.eq.f32.partialorder %v814, %v816
  %v818 = vsel %vm817, %v813, inf
  %819 = vmin.xlane.f32.xlu0 %v818
  %v820 = vpop.xlane.xlu0 %819
  %v821 = vcvt.f32.s32 %v820
  %v822 = vcvt.f32.s32 %v816
  %v823 = vshll.u32 %v822, 16
  %v824 = vadd.s32 %v823, %v821
  %vm825 = vcmask 7168
  %826 = vst.msk [vmem:[%s5] sm:$0xff] %vm825, %v824
  // Predicated region
  $region22: #{healthy_plant_predict.1} parent=0 // pred_check
    _
  $region23: #{healthy_plant_predict.1} parent=0 // pred_check_branch
    %828 = sbr.rel (0) target = $region25
  $region24: #{healthy_plant_predict.1} parent=0 // pred_region
    _
  $region25: #{healthy_plant_predict.1} parent=0 // pred_fallthru
    _
  // Predicated region
  $region26: #{healthy_plant_predict.1} parent=0 // pred_check
    _
  $region27: #{healthy_plant_predict.1} parent=0 // pred_check_branch
    %830 = sbr.rel (0) target = $region29
  $region28: #{healthy_plant_predict.1} parent=0 // pred_region
    _
  $region29: #{healthy_plant_predict.1} parent=0 // pred_fallthru
    _

</llo_original>
